<compile_context>
chip_gen: v7x
topology: tpu7x:2x2x1
jax: 0.10.0
libtpu: 0.0.40
codegen_flags: <defaults>
</compile_context>

<pallas_src>
import functools

import jax
import jax.numpy as jnp
from jax.experimental import pallas as pl
from jax.experimental.pallas import tpu as pltpu


def _round_up(x, m):
    return ((x + m - 1) // m) * m


def _conv_gelu_stats_kernel(p_ref, w_ref, b_ref, y_ref, sum_ref, sq_ref,
                            *, m_real, tile_m, c_out):
    # p_ref:   (TILE_M, K_pad)     bf16 im2col patches
    # w_ref:   (K_pad, C_mm)       bf16 flattened conv weight (C padded to 128 for the MXU)
    # b_ref:   (1, C_out)          f32 conv bias
    # y_ref:   (TILE_M, C_out)     f32 GELU(conv) activation (channel-narrow)
    # sum_ref: (1, 1, C_out)       f32 per-tile partial channel sum
    # sq_ref:  (1, 1, C_out)       f32 per-tile partial channel sum-of-squares
    i = pl.program_id(0)
    n_last = pl.num_programs(0) - 1

    # Conv as matmul: bf16 operands, f32 accumulation on the MXU.
    acc = jnp.dot(p_ref[...], w_ref[...], preferred_element_type=jnp.float32)
    y = acc[:, :c_out] + b_ref[...]                       # (TILE_M, C_out) f32

    # Exact GELU (PyTorch nn.GELU default, approximate='none'), kept in f32.
    # TODO(synk): erf is a long VALU polynomial chain; if the consumer tolerates the
    # tanh-approximate GELU, switch so the transcendental moves to the EUP slot.
    y = 0.5 * y * (1.0 + jax.lax.erf(y * 0.7071067811865476))
    y_ref[...] = y

    def _write_stats(v):
        sum_ref[...] = jnp.sum(v, axis=0, keepdims=True)[None]
        sq_ref[...] = jnp.sum(v * v, axis=0, keepdims=True)[None]

    @pl.when(i != n_last)
    def _():                                              # full tiles: no masking cost
        _write_stats(y)

    @pl.when(i == n_last)
    def _():                                              # mask padded rows out of stats
        row = i * tile_m + jax.lax.broadcasted_iota(jnp.int32, y.shape, 0)
        _write_stats(jnp.where(row < m_real, y, 0.0))


def _bn_apply_kernel(y_ref, s_ref, t_ref, o_ref):
    # Batch-norm as a single multiply-add: scale/shift precomputed in the wrapper.
    o_ref[...] = y_ref[...] * s_ref[...] + t_ref[...]


def downunit_forward(x, conv_w, conv_b, bn_gamma, bn_beta,
                     kernel_size, stride, padding, tile_m_max=1024):
    """x: NCHW float32. Returns NCHW float32 with spatial dims reduced by `stride`."""
    B, C_in, H, W = x.shape
    C_out = conv_w.shape[0]
    K = kernel_size
    H_out = (H + 2 * padding - K) // stride + 1
    W_out = (W + 2 * padding - K) // stride + 1
    M = B * H_out * W_out
    Kdim = C_in * K * K

    LANE = 128
    K_pad = _round_up(Kdim, 8)            # minor dim == full array dim; no 128-pad in HBM
    C_mm = _round_up(C_out, LANE)         # matmul RHS width only (tiny weight operand)
    tile_m = min(tile_m_max, _round_up(M, 8))
    M_pad = _round_up(M, tile_m)
    n_tiles = M_pad // tile_m

    # ---- plain-JAX glue: im2col patch extraction (NHWC row order) ----------
    # TODO(synk): fold the KxK strided patch extraction into the kernel (NHWC input,
    # per-tap accumulation) to remove the K*K im2col duplication in HBM entirely.
    x_p = jnp.pad(x, ((0, 0), (0, 0), (padding, padding), (padding, padding)))
    cols = []
    for kh in range(K):
        for kw in range(K):
            cols.append(
                x_p[:, :,
                    kh:kh + stride * H_out:stride,
                    kw:kw + stride * W_out:stride])        # (B, C_in, H_out, W_out)
    patches = jnp.stack(cols, axis=2)                      # (B, C_in, K*K, H_out, W_out)
    patches = jnp.transpose(patches, (0, 3, 4, 1, 2))      # (B, H_out, W_out, C_in, K*K)
    patches = patches.reshape(M, Kdim)
    patches = jnp.pad(patches, ((0, M_pad - M), (0, K_pad - Kdim))).astype(jnp.bfloat16)

    # Flatten weight consistently with PyTorch (C_out, C_in, KH, KW) ordering.
    w_mat = conv_w.reshape(C_out, Kdim).T                  # (Kdim, C_out)
    w_mat = jnp.pad(w_mat, ((0, K_pad - Kdim), (0, C_mm - C_out))).astype(jnp.bfloat16)
    b_row = conv_b.reshape(1, C_out).astype(jnp.float32)

    # ---- pass 1: conv matmul + bias + GELU + per-tile channel sum/sumsq ----
    conv_cost = pl.CostEstimate(
        flops=2 * M_pad * K_pad * C_mm,
        transcendentals=M_pad * C_out,
        bytes_accessed=(patches.size * 2 + w_mat.size * 2 + C_out * 4
                        + M_pad * C_out * 4 + 2 * n_tiles * C_out * 4))

    y_gelu, p_sum, p_sq = pl.pallas_call(
        functools.partial(_conv_gelu_stats_kernel,
                          m_real=M, tile_m=tile_m, c_out=C_out),
        out_shape=(jax.ShapeDtypeStruct((M_pad, C_out), jnp.float32),
                   jax.ShapeDtypeStruct((n_tiles, 1, C_out), jnp.float32),
                   jax.ShapeDtypeStruct((n_tiles, 1, C_out), jnp.float32)),
        grid_spec=pltpu.PrefetchScalarGridSpec(
            num_scalar_prefetch=0,
            grid=(n_tiles,),
            in_specs=[pl.BlockSpec((tile_m, K_pad), lambda i: (i, 0)),
                      pl.BlockSpec((K_pad, C_mm), lambda i: (0, 0)),
                      pl.BlockSpec((1, C_out), lambda i: (0, 0))],
            out_specs=[pl.BlockSpec((tile_m, C_out), lambda i: (i, 0)),
                       pl.BlockSpec((1, 1, C_out), lambda i: (i, 0, 0)),
                       pl.BlockSpec((1, 1, C_out), lambda i: (i, 0, 0))]),
        compiler_params=pltpu.CompilerParams(
            dimension_semantics=("parallel",)),            # per-tile stats -> megacore OK
        cost_estimate=conv_cost,
    )(patches, w_mat, b_row)

    # ---- tiny XLA reduction: global batch stats -> per-channel scale/shift --
    # TODO(synk): BatchNorm2d running_mean/running_var momentum updates are a training
    #             side effect and are not computed/returned here.
    # TODO(synk): E[x^2]-E[x]^2 in f32 can cancel for very large M; switch to a
    #             compensated/centered reduction if tolerances vs PyTorch get tight.
    inv_m = 1.0 / float(M)
    mean = jnp.sum(p_sum, axis=(0, 1)) * inv_m
    var = jnp.maximum(jnp.sum(p_sq, axis=(0, 1)) * inv_m - mean * mean, 0.0)  # biased var
    inv_std = jax.lax.rsqrt(var + 1e-5)
    scale_v = bn_gamma.astype(jnp.float32) * inv_std
    shift_v = bn_beta.astype(jnp.float32) - mean * scale_v
    scale = scale_v.reshape(1, C_out)
    shift = shift_v.reshape(1, C_out)

    # ---- pass 2: batch-norm apply (single FMA per element, mem-bound) -------
    out = pl.pallas_call(
        _bn_apply_kernel,
        out_shape=jax.ShapeDtypeStruct((M_pad, C_out), jnp.float32),
        grid_spec=pltpu.PrefetchScalarGridSpec(
            num_scalar_prefetch=0,
            grid=(n_tiles,),
            in_specs=[pl.BlockSpec((tile_m, C_out), lambda i: (i, 0)),
                      pl.BlockSpec((1, C_out), lambda i: (0, 0)),
                      pl.BlockSpec((1, C_out), lambda i: (0, 0))],
            out_specs=pl.BlockSpec((tile_m, C_out), lambda i: (i, 0))),
        compiler_params=pltpu.CompilerParams(
            dimension_semantics=("parallel",)),
    )(y_gelu, scale, shift)

    # Slice off M padding, back to image layout.
    out = out[:M].reshape(B, H_out, W_out, C_out)
    # TODO(synk): keep NHWC end-to-end if downstream allows; NCHW only to match the
    #             PyTorch module's contract.
    return jnp.transpose(out, (0, 3, 1, 2))


if __name__ == "__main__":
    # Module config (mirrors DownUnit.__init__ padding math):
    in_shape = (16, 16)
    in_channels, out_channels = 4, 8
    kernel_size, downsample_factor = 3, 2
    stride, dilation = downsample_factor, 1
    desired_height = in_shape[0] // stride
    height_without_padding = (in_shape[0] - dilation * (kernel_size - 1) - 1) // stride + 1
    necessary_padding = ((desired_height - height_without_padding) * stride + 1) // 2

    key = jax.random.PRNGKey(0)
    kx, kw, kb, kg, kbe = jax.random.split(key, 5)
    x = jax.random.normal(kx, (2, in_channels, *in_shape), dtype=jnp.float32)
    conv_w = jax.random.normal(
        kw, (out_channels, in_channels, kernel_size, kernel_size), dtype=jnp.float32) * 0.1
    conv_b = jax.random.normal(kb, (out_channels,), dtype=jnp.float32) * 0.1
    bn_gamma = 1.0 + 0.1 * jax.random.normal(kg, (out_channels,), dtype=jnp.float32)
    bn_beta = 0.1 * jax.random.normal(kbe, (out_channels,), dtype=jnp.float32)

    fwd = jax.jit(functools.partial(
        downunit_forward,
        kernel_size=kernel_size, stride=stride, padding=necessary_padding))
    y = fwd(x, conv_w, conv_b, bn_gamma, bn_beta)
    jax.block_until_ready(y)
    assert y.shape == (2, out_channels, in_shape[0] // stride, in_shape[1] // stride)
    assert bool(jnp.all(jnp.isfinite(y)))
    print("KERNEL_OK")
</pallas_src>

<mosaic_0001>
module attributes {stable_mosaic.version = 11 : i64} {
  func.func @_conv_gelu_stats_kernel(%arg0: i32, %arg1: memref<128x40xbf16, #tpu.memory_space<vmem>>, %arg2: memref<40x128xbf16, #tpu.memory_space<vmem>>, %arg3: memref<1x8xf32, #tpu.memory_space<vmem>>, %arg4: memref<128x8xf32, #tpu.memory_space<vmem>>, %arg5: memref<1x1x8xf32, #tpu.memory_space<vmem>>, %arg6: memref<1x1x8xf32, #tpu.memory_space<vmem>>) attributes {dimension_semantics = [#tpu.dimension_semantics<parallel>], iteration_bounds = array<i64: 1>, scalar_prefetch = 0 : i64, scratch_operands = 0 : i64, tpu.core_type = #tpu.core_type<tc>, window_params = [{transform_indices = @transform_0, window_bounds = array<i64: 128, 40>}, {pipeline_mode = #tpu.pipeline_mode<synchronous>, transform_indices = @transform_1, window_bounds = array<i64: 40, 128>}, {pipeline_mode = #tpu.pipeline_mode<synchronous>, transform_indices = @transform_2, window_bounds = array<i64: 1, 8>}, {transform_indices = @transform_3, window_bounds = array<i64: 128, 8>}, {transform_indices = @transform_4, window_bounds = array<i64: 1, 1, 8>}, {transform_indices = @transform_5, window_bounds = array<i64: 1, 1, 8>}]} {
    %c0 = arith.constant 0 : index
    %c0_0 = arith.constant 0 : index
    %0 = vector.load %arg1[%c0, %c0_0] : memref<128x40xbf16, #tpu.memory_space<vmem>>, vector<128x40xbf16>
    %c0_1 = arith.constant 0 : index
    %c0_2 = arith.constant 0 : index
    %1 = vector.load %arg2[%c0_1, %c0_2] : memref<40x128xbf16, #tpu.memory_space<vmem>>, vector<40x128xbf16>
    %cst = arith.constant dense<0.000000e+00> : vector<128x128xf32>
    %2 = tpu.matmul %0, %1, %cst {dimension_numbers = #tpu.dot_dimension_numbers<[1], [0], [0], [1], [0, 0, 1, 1], [], []>} : vector<128x40xbf16>, vector<40x128xbf16>, vector<128x128xf32> -> vector<128x128xf32>
    %3 = vector.extract_strided_slice %2 {offsets = [0, 0], sizes = [128, 8], strides = [1, 1]} : vector<128x128xf32> to vector<128x8xf32>
    %c0_3 = arith.constant 0 : index
    %c0_4 = arith.constant 0 : index
    %4 = vector.load %arg3[%c0_3, %c0_4] : memref<1x8xf32, #tpu.memory_space<vmem>>, vector<1x8xf32>
    %5 = vector.broadcast %4 : vector<1x8xf32> to vector<128x8xf32>
    %6 = arith.addf %3, %5 : vector<128x8xf32>
    %cst_5 = arith.constant 5.000000e-01 : f32
    %7 = vector.broadcast %cst_5 : f32 to vector<128x8xf32>
    %8 = arith.mulf %7, %6 : vector<128x8xf32>
    %cst_6 = arith.constant 0.707106769 : f32
    %9 = vector.broadcast %cst_6 : f32 to vector<128x8xf32>
    %10 = arith.mulf %6, %9 : vector<128x8xf32>
    %11 = math.erf %10 : vector<128x8xf32>
    %cst_7 = arith.constant 1.000000e+00 : f32
    %12 = vector.broadcast %cst_7 : f32 to vector<128x8xf32>
    %13 = arith.addf %12, %11 : vector<128x8xf32>
    %14 = arith.mulf %8, %13 : vector<128x8xf32>
    %c0_8 = arith.constant 0 : index
    %c0_9 = arith.constant 0 : index
    %15 = vector.load %arg4[%c0_8, %c0_9] : memref<128x8xf32, #tpu.memory_space<vmem>>, vector<128x8xf32>
    tpu.vector_store %arg4[%c0_8, %c0_9], %14 {strides = array<i32>} : memref<128x8xf32, #tpu.memory_space<vmem>>, vector<128x8xf32>,
    %c0_i32 = arith.constant 0 : i32
    %16 = arith.cmpi ne, %arg0, %c0_i32 : i32
    %17 = arith.extui %16 : i1 to i32
    %c0_i32_10 = arith.constant 0 : i32
    %18 = arith.cmpi ne, %17, %c0_i32_10 : i32
    scf.if %18 {
      %cst_13 = arith.constant dense<0.000000e+00> : vector<8xf32>
      %22 = vector.multi_reduction <add>, %14, %cst_13 [0] : vector<128x8xf32> to vector<8xf32>
      %23 = vector.shape_cast %22 : vector<8xf32> to vector<1x8xf32>
      %24 = vector.shape_cast %23 : vector<1x8xf32> to vector<1x1x8xf32>
      %c0_14 = arith.constant 0 : index
      %c0_15 = arith.constant 0 : index
      %c0_16 = arith.constant 0 : index
      %25 = vector.load %arg5[%c0_14, %c0_15, %c0_16] : memref<1x1x8xf32, #tpu.memory_space<vmem>>, vector<1x1x8xf32>
      tpu.vector_store %arg5[%c0_14, %c0_15, %c0_16], %24 {strides = array<i32>} : memref<1x1x8xf32, #tpu.memory_space<vmem>>, vector<1x1x8xf32>,
      %26 = arith.mulf %14, %14 : vector<128x8xf32>
      %cst_17 = arith.constant dense<0.000000e+00> : vector<8xf32>
      %27 = vector.multi_reduction <add>, %26, %cst_17 [0] : vector<128x8xf32> to vector<8xf32>
      %28 = vector.shape_cast %27 : vector<8xf32> to vector<1x8xf32>
      %29 = vector.shape_cast %28 : vector<1x8xf32> to vector<1x1x8xf32>
      %c0_18 = arith.constant 0 : index
      %c0_19 = arith.constant 0 : index
      %c0_20 = arith.constant 0 : index
      %30 = vector.load %arg6[%c0_18, %c0_19, %c0_20] : memref<1x1x8xf32, #tpu.memory_space<vmem>>, vector<1x1x8xf32>
      tpu.vector_store %arg6[%c0_18, %c0_19, %c0_20], %29 {strides = array<i32>} : memref<1x1x8xf32, #tpu.memory_space<vmem>>, vector<1x1x8xf32>,
    } else {
    }
    %c0_i32_11 = arith.constant 0 : i32
    %19 = arith.cmpi eq, %arg0, %c0_i32_11 : i32
    %20 = arith.extui %19 : i1 to i32
    %c0_i32_12 = arith.constant 0 : i32
    %21 = arith.cmpi ne, %20, %c0_i32_12 : i32
    scf.if %21 {
      %c128_i32 = arith.constant 128 : i32
      %22 = arith.muli %arg0, %c128_i32 : i32
      %23 = tpu.iota {dimensions = array<i32: 0>} : vector<128x8xi32>
      %24 = vector.broadcast %22 : i32 to vector<128x8xi32>
      %25 = arith.addi %24, %23 : vector<128x8xi32>
      %c128_i32_13 = arith.constant 128 : i32
      %26 = vector.broadcast %c128_i32_13 : i32 to vector<128x8xi32>
      %27 = arith.cmpi slt, %25, %26 : vector<128x8xi32>
      %cst_14 = arith.constant 0.000000e+00 : f32
      %28 = vector.broadcast %cst_14 : f32 to vector<128x8xf32>
      %29 = arith.select %27, %14, %28 : vector<128x8xi1>, vector<128x8xf32>
      %cst_15 = arith.constant dense<0.000000e+00> : vector<8xf32>
      %30 = vector.multi_reduction <add>, %29, %cst_15 [0] : vector<128x8xf32> to vector<8xf32>
      %31 = vector.shape_cast %30 : vector<8xf32> to vector<1x8xf32>
      %32 = vector.shape_cast %31 : vector<1x8xf32> to vector<1x1x8xf32>
      %c0_16 = arith.constant 0 : index
      %c0_17 = arith.constant 0 : index
      %c0_18 = arith.constant 0 : index
      %33 = vector.load %arg5[%c0_16, %c0_17, %c0_18] : memref<1x1x8xf32, #tpu.memory_space<vmem>>, vector<1x1x8xf32>
      tpu.vector_store %arg5[%c0_16, %c0_17, %c0_18], %32 {strides = array<i32>} : memref<1x1x8xf32, #tpu.memory_space<vmem>>, vector<1x1x8xf32>,
      %34 = arith.mulf %29, %29 : vector<128x8xf32>
      %cst_19 = arith.constant dense<0.000000e+00> : vector<8xf32>
      %35 = vector.multi_reduction <add>, %34, %cst_19 [0] : vector<128x8xf32> to vector<8xf32>
      %36 = vector.shape_cast %35 : vector<8xf32> to vector<1x8xf32>
      %37 = vector.shape_cast %36 : vector<1x8xf32> to vector<1x1x8xf32>
      %c0_20 = arith.constant 0 : index
      %c0_21 = arith.constant 0 : index
      %c0_22 = arith.constant 0 : index
      %38 = vector.load %arg6[%c0_20, %c0_21, %c0_22] : memref<1x1x8xf32, #tpu.memory_space<vmem>>, vector<1x1x8xf32>
      tpu.vector_store %arg6[%c0_20, %c0_21, %c0_22], %37 {strides = array<i32>} : memref<1x1x8xf32, #tpu.memory_space<vmem>>, vector<1x1x8xf32>,
    } else {
    }
    return
  }
  func.func @transform_0(%arg0: i32) -> (i32, i32) {
    %c0_i32 = arith.constant 0 : i32
    %c0_i32_0 = arith.constant 0 : i32
    return %arg0, %c0_i32 : i32, i32
  }
  func.func @transform_1(%arg0: i32) -> (i32, i32) {
    %c0_i32 = arith.constant 0 : i32
    %c0_i32_0 = arith.constant 0 : i32
    %c0_i32_1 = arith.constant 0 : i32
    return %c0_i32, %c0_i32_0 : i32, i32
  }
  func.func @transform_2(%arg0: i32) -> (i32, i32) {
    %c0_i32 = arith.constant 0 : i32
    %c0_i32_0 = arith.constant 0 : i32
    %c0_i32_1 = arith.constant 0 : i32
    return %c0_i32, %c0_i32_0 : i32, i32
  }
  func.func @transform_3(%arg0: i32) -> (i32, i32) {
    %c0_i32 = arith.constant 0 : i32
    %c0_i32_0 = arith.constant 0 : i32
    return %arg0, %c0_i32 : i32, i32
  }
  func.func @transform_4(%arg0: i32) -> (i32, i32, i32) {
    %c0_i32 = arith.constant 0 : i32
    %c0_i32_0 = arith.constant 0 : i32
    %c0_i32_1 = arith.constant 0 : i32
    return %arg0, %c0_i32, %c0_i32_0 : i32, i32, i32
  }
  func.func @transform_5(%arg0: i32) -> (i32, i32, i32) {
    %c0_i32 = arith.constant 0 : i32
    %c0_i32_0 = arith.constant 0 : i32
    %c0_i32_1 = arith.constant 0 : i32
    return %arg0, %c0_i32, %c0_i32_0 : i32, i32, i32
  }
}

module attributes {stable_mosaic.version = 11 : i64} {
  func.func @_bn_apply_kernel(%arg0: i32, %arg1: memref<128x8xf32, #tpu.memory_space<vmem>>, %arg2: memref<1x8xf32, #tpu.memory_space<vmem>>, %arg3: memref<1x8xf32, #tpu.memory_space<vmem>>, %arg4: memref<128x8xf32, #tpu.memory_space<vmem>>) attributes {dimension_semantics = [#tpu.dimension_semantics<parallel>], iteration_bounds = array<i64: 1>, scalar_prefetch = 0 : i64, scratch_operands = 0 : i64, tpu.core_type = #tpu.core_type<tc>, window_params = [{transform_indices = @transform_0, window_bounds = array<i64: 128, 8>}, {pipeline_mode = #tpu.pipeline_mode<synchronous>, transform_indices = @transform_1, window_bounds = array<i64: 1, 8>}, {pipeline_mode = #tpu.pipeline_mode<synchronous>, transform_indices = @transform_2, window_bounds = array<i64: 1, 8>}, {transform_indices = @transform_3, window_bounds = array<i64: 128, 8>}]} {
    %c0 = arith.constant 0 : index
    %c0_0 = arith.constant 0 : index
    %0 = vector.load %arg1[%c0, %c0_0] : memref<128x8xf32, #tpu.memory_space<vmem>>, vector<128x8xf32>
    %c0_1 = arith.constant 0 : index
    %c0_2 = arith.constant 0 : index
    %1 = vector.load %arg2[%c0_1, %c0_2] : memref<1x8xf32, #tpu.memory_space<vmem>>, vector<1x8xf32>
    %2 = vector.broadcast %1 : vector<1x8xf32> to vector<128x8xf32>
    %3 = arith.mulf %0, %2 : vector<128x8xf32>
    %c0_3 = arith.constant 0 : index
    %c0_4 = arith.constant 0 : index
    %4 = vector.load %arg3[%c0_3, %c0_4] : memref<1x8xf32, #tpu.memory_space<vmem>>, vector<1x8xf32>
    %5 = vector.broadcast %4 : vector<1x8xf32> to vector<128x8xf32>
    %6 = arith.addf %3, %5 : vector<128x8xf32>
    %c0_5 = arith.constant 0 : index
    %c0_6 = arith.constant 0 : index
    %7 = vector.load %arg4[%c0_5, %c0_6] : memref<128x8xf32, #tpu.memory_space<vmem>>, vector<128x8xf32>
    tpu.vector_store %arg4[%c0_5, %c0_6], %6 {strides = array<i32>} : memref<128x8xf32, #tpu.memory_space<vmem>>, vector<128x8xf32>,
    return
  }
  func.func @transform_0(%arg0: i32) -> (i32, i32) {
    %c0_i32 = arith.constant 0 : i32
    %c0_i32_0 = arith.constant 0 : i32
    return %arg0, %c0_i32 : i32, i32
  }
  func.func @transform_1(%arg0: i32) -> (i32, i32) {
    %c0_i32 = arith.constant 0 : i32
    %c0_i32_0 = arith.constant 0 : i32
    %c0_i32_1 = arith.constant 0 : i32
    return %c0_i32, %c0_i32_0 : i32, i32
  }
  func.func @transform_2(%arg0: i32) -> (i32, i32) {
    %c0_i32 = arith.constant 0 : i32
    %c0_i32_0 = arith.constant 0 : i32
    %c0_i32_1 = arith.constant 0 : i32
    return %c0_i32, %c0_i32_0 : i32, i32
  }
  func.func @transform_3(%arg0: i32) -> (i32, i32) {
    %c0_i32 = arith.constant 0 : i32
    %c0_i32_0 = arith.constant 0 : i32
    return %arg0, %c0_i32 : i32, i32
  }
}

</mosaic_0001>

<llo_original>
// kernel: downunit_forward.3
$region0: #{downunit_forward.3}
  #allocation0 [shape = 'u32[]', space=smem, size = 0x4, offset = 0x4, fixed_abs, tag = 'smem constant byte address 0x4 - core index']
  #allocation1 [shape = 'u32[144,128]{1,0:T(1,128)}', space=vmem, size = 0x12000, scoped, tag = 'internal scratch']
  %s0 = inlined_call_operand.vmem [shape: f32[128,8], index: 0, kind: input, shape index: {}]
  %s1 = inlined_call_operand.vmem [shape: f32[1,8], index: 1, kind: input, shape index: {}]
  %s2 = inlined_call_operand.vmem [shape: f32[1,8], index: 2, kind: input, shape index: {}]
  %s3 = inlined_call_operand.vmem [shape: f32[128,8], index: 3, kind: output, shape index: {}]
  %s4 = sld [smem:[#allocation0]]
  $region22: #{downunit_forward.3} parent=0
    _
  %s6 = ssub.s32 1, %s4
  %s7 = scalar_select 0, %s6, %s4
  // Predicated region
  $region2: #{downunit_forward.3} parent=0 // pred_check
    _
  $region3: #{downunit_forward.3} parent=0 // pred_check_branch
    %9 = sbr.rel (0) target = $region5
  $region4: #{downunit_forward.3} parent=0 // pred_region
    _
  $region5: #{downunit_forward.3} parent=0 // pred_fallthru
    _
  // Predicated region
  $region6: #{downunit_forward.3} parent=0 // pred_check
    _
  $region7: #{downunit_forward.3} parent=0 // pred_check_branch
    %11 = sbr.rel (0) target = $region9
  $region8: #{downunit_forward.3} parent=0 // pred_region
    _
  $region9: #{downunit_forward.3} parent=0 // pred_fallthru
    _
  // Predicated region
  $region10: #{downunit_forward.3} parent=0 // pred_check
    _
  $region11: #{downunit_forward.3} parent=0 // pred_check_branch
    %13 = sbr.rel (0) target = $region13
  $region12: #{downunit_forward.3} parent=0 // pred_region
    _
  $region13: #{downunit_forward.3} parent=0 // pred_fallthru
    _
  %v14 = vld [vmem:[%s0] sm:$0xff]
  %v15 = vld [vmem:[%s0 + $0x8] sm:$0xff]
  %v16 = vld [vmem:[%s0 + $0x10] sm:$0xff]
  %v17 = vld [vmem:[%s0 + $0x18] sm:$0xff]
  %v18 = vld [vmem:[%s0 + $0x20] sm:$0xff]
  %v19 = vld [vmem:[%s0 + $0x28] sm:$0xff]
  %v20 = vld [vmem:[%s0 + $0x30] sm:$0xff]
  %v21 = vld [vmem:[%s0 + $0x38] sm:$0xff]
  %v22 = vld [vmem:[%s0 + $0x40] sm:$0xff]
  %v23 = vld [vmem:[%s0 + $0x48] sm:$0xff]
  %v24 = vld [vmem:[%s0 + $0x50] sm:$0xff]
  %v25 = vld [vmem:[%s0 + $0x58] sm:$0xff]
  %v26 = vld [vmem:[%s0 + $0x60] sm:$0xff]
  %v27 = vld [vmem:[%s0 + $0x68] sm:$0xff]
  %v28 = vld [vmem:[%s0 + $0x70] sm:$0xff]
  %v29 = vld [vmem:[%s0 + $0x78] sm:$0xff]
  %v30 = vld [vmem:[%s1] sm:$0x1]
  %v32 = vlaneseq
  %v33 = vshrl.u32 %v32, 7
  %v34 = vsub.s32 0, %v33
  %v35 = vrot.slane %v30, %v34
  %v37 = vmul.f32 %v14, %v35
  %v38 = vmul.f32 %v15, %v35
  %v39 = vmul.f32 %v16, %v35
  %v40 = vmul.f32 %v17, %v35
  %v41 = vmul.f32 %v18, %v35
  %v42 = vmul.f32 %v19, %v35
  %v43 = vmul.f32 %v20, %v35
  %v44 = vmul.f32 %v21, %v35
  %v45 = vmul.f32 %v22, %v35
  %v46 = vmul.f32 %v23, %v35
  %v47 = vmul.f32 %v24, %v35
  %v48 = vmul.f32 %v25, %v35
  %v49 = vmul.f32 %v26, %v35
  %v50 = vmul.f32 %v27, %v35
  %v51 = vmul.f32 %v28, %v35
  %v52 = vmul.f32 %v29, %v35
  %v53 = vld [vmem:[%s2] sm:$0x1]
  %v55 = vlaneseq
  %v56 = vshrl.u32 %v55, 7
  %v57 = vsub.s32 0, %v56
  %v58 = vrot.slane %v53, %v57
  %v60 = vadd.f32 %v37, %v58
  %v61 = vadd.f32 %v38, %v58
  %v62 = vadd.f32 %v39, %v58
  %v63 = vadd.f32 %v40, %v58
  %v64 = vadd.f32 %v41, %v58
  %v65 = vadd.f32 %v42, %v58
  %v66 = vadd.f32 %v43, %v58
  %v67 = vadd.f32 %v44, %v58
  %v68 = vadd.f32 %v45, %v58
  %v69 = vadd.f32 %v46, %v58
  %v70 = vadd.f32 %v47, %v58
  %v71 = vadd.f32 %v48, %v58
  %v72 = vadd.f32 %v49, %v58
  %v73 = vadd.f32 %v50, %v58
  %v74 = vadd.f32 %v51, %v58
  %v75 = vadd.f32 %v52, %v58
  %vm76 = vcmask 64512
  %77 = vst.msk [vmem:[%s3] sm:$0xff] %vm76, %v60
  %78 = vst.msk [vmem:[%s3 + $0x8] sm:$0xff] %vm76, %v61
  %79 = vst.msk [vmem:[%s3 + $0x10] sm:$0xff] %vm76, %v62
  %80 = vst.msk [vmem:[%s3 + $0x18] sm:$0xff] %vm76, %v63
  %81 = vst.msk [vmem:[%s3 + $0x20] sm:$0xff] %vm76, %v64
  %82 = vst.msk [vmem:[%s3 + $0x28] sm:$0xff] %vm76, %v65
  %83 = vst.msk [vmem:[%s3 + $0x30] sm:$0xff] %vm76, %v66
  %84 = vst.msk [vmem:[%s3 + $0x38] sm:$0xff] %vm76, %v67
  %85 = vst.msk [vmem:[%s3 + $0x40] sm:$0xff] %vm76, %v68
  %86 = vst.msk [vmem:[%s3 + $0x48] sm:$0xff] %vm76, %v69
  %87 = vst.msk [vmem:[%s3 + $0x50] sm:$0xff] %vm76, %v70
  %88 = vst.msk [vmem:[%s3 + $0x58] sm:$0xff] %vm76, %v71
  %89 = vst.msk [vmem:[%s3 + $0x60] sm:$0xff] %vm76, %v72
  %90 = vst.msk [vmem:[%s3 + $0x68] sm:$0xff] %vm76, %v73
  %91 = vst.msk [vmem:[%s3 + $0x70] sm:$0xff] %vm76, %v74
  %92 = vst.msk [vmem:[%s3 + $0x78] sm:$0xff] %vm76, %v75
  // Predicated region
  $region14: #{downunit_forward.3} parent=0 // pred_check
    _
  $region15: #{downunit_forward.3} parent=0 // pred_check_branch
    %94 = sbr.rel (0) target = $region17
  $region16: #{downunit_forward.3} parent=0 // pred_region
    _
  $region17: #{downunit_forward.3} parent=0 // pred_fallthru
    _
  // Predicated region
  $region18: #{downunit_forward.3} parent=0 // pred_check
    _
  $region19: #{downunit_forward.3} parent=0 // pred_check_branch
    %96 = sbr.rel (0) target = $region21
  $region20: #{downunit_forward.3} parent=0 // pred_region
    _
  $region21: #{downunit_forward.3} parent=0 // pred_fallthru
    _

// kernel: downunit_forward.2
$region0: #{downunit_forward.2}
  #allocation0 [shape = 'u32[]', space=smem, size = 0x4, offset = 0x4, fixed_abs, tag = 'smem constant byte address 0x4 - core index']
  #allocation1 [shape = 'u32[144,128]{1,0:T(1,128)}', space=vmem, size = 0x12000, scoped, tag = 'internal scratch']
  %s0 = inlined_call_operand.vmem [shape: bf16[128,40], index: 0, kind: input, shape index: {}]
  %s1 = inlined_call_operand.vmem [shape: bf16[40,128], index: 1, kind: input, shape index: {}]
  %s2 = inlined_call_operand.vmem [shape: f32[1,8], index: 2, kind: input, shape index: {}]
  %s3 = inlined_call_operand.vmem [shape: f32[128,8], index: 3, kind: output, shape index: {0}]
  %s4 = inlined_call_operand.vmem [shape: f32[1,1,8], index: 4, kind: output, shape index: {1}]
  %s5 = inlined_call_operand.vmem [shape: f32[1,1,8], index: 5, kind: output, shape index: {2}]
  %6 = xla_tuple %s3, %s4, %s5
  %s7 = sld [smem:[#allocation0]]
  $region46: #{downunit_forward.2} parent=0
    _
  %s9 = ssub.s32 1, %s7
  %s10 = scalar_select 0, %s9, %s7
  // Predicated region
  $region2: #{downunit_forward.2} parent=0 // pred_check
    _
  $region3: #{downunit_forward.2} parent=0 // pred_check_branch
    %12 = sbr.rel (0) target = $region5
  $region4: #{downunit_forward.2} parent=0 // pred_region
    _
  $region5: #{downunit_forward.2} parent=0 // pred_fallthru
    _
  // Predicated region
  $region6: #{downunit_forward.2} parent=0 // pred_check
    _
  $region7: #{downunit_forward.2} parent=0 // pred_check_branch
    %14 = sbr.rel (0) target = $region9
  $region8: #{downunit_forward.2} parent=0 // pred_region
    _
  $region9: #{downunit_forward.2} parent=0 // pred_fallthru
    _
  // Predicated region
  $region10: #{downunit_forward.2} parent=0 // pred_check
    _
  $region11: #{downunit_forward.2} parent=0 // pred_check_branch
    %16 = sbr.rel (0) target = $region13
  $region12: #{downunit_forward.2} parent=0 // pred_region
    _
  $region13: #{downunit_forward.2} parent=0 // pred_fallthru
    _
  %v18 = vld [vmem:[%s0] sm:$0xf]
  %v19 = vld [vmem:[%s0 + $0x4] sm:$0xf]
  %v20 = vld [vmem:[%s0 + $0x8] sm:$0xf]
  %v21 = vld [vmem:[%s0 + $0xc] sm:$0xf]
  %v22 = vld [vmem:[%s0 + $0x10] sm:$0xf]
  %v23 = vld [vmem:[%s0 + $0x14] sm:$0xf]
  %v24 = vld [vmem:[%s0 + $0x18] sm:$0xf]
  %v25 = vld [vmem:[%s0 + $0x1c] sm:$0xf]
  %v26 = vld [vmem:[%s0 + $0x20] sm:$0xf]
  %v27 = vld [vmem:[%s0 + $0x24] sm:$0xf]
  %v28 = vld [vmem:[%s0 + $0x28] sm:$0xf]
  %v29 = vld [vmem:[%s0 + $0x2c] sm:$0xf]
  %v30 = vld [vmem:[%s0 + $0x30] sm:$0xf]
  %v31 = vld [vmem:[%s0 + $0x34] sm:$0xf]
  %v32 = vld [vmem:[%s0 + $0x38] sm:$0xf]
  %v33 = vld [vmem:[%s0 + $0x3c] sm:$0xf]
  %v34 = vld [vmem:[%s1] sm:$0xf]
  %v35 = vld [vmem:[%s1 + $0x4] sm:$0xf]
  %v36 = vld [vmem:[%s1 + $0x8] sm:$0xf]
  %v37 = vld [vmem:[%s1 + $0xc] sm:$0xf]
  %v38 = vld [vmem:[%s1 + $0x10] sm:$0xf]
  %v55 = vunpack.c.l.b16 %v18
  %v56 = vunpack.c.l.b16 %v19
  %v57 = vunpack.c.l.b16 %v20
  %v58 = vunpack.c.l.b16 %v21
  %v59 = vunpack.c.l.b16 %v22
  %v60 = vunpack.c.l.b16 %v23
  %v61 = vunpack.c.l.b16 %v24
  %v62 = vunpack.c.l.b16 %v25
  %v63 = vunpack.c.l.b16 %v26
  %v64 = vunpack.c.l.b16 %v27
  %v65 = vunpack.c.l.b16 %v28
  %v66 = vunpack.c.l.b16 %v29
  %v67 = vunpack.c.l.b16 %v30
  %v68 = vunpack.c.l.b16 %v31
  %v69 = vunpack.c.l.b16 %v32
  %v70 = vunpack.c.l.b16 %v33
  %v71 = vpack.c.b16 %v56, %v55
  %v72 = vpack.c.b16 %v58, %v57
  %v73 = vpack.c.b16 %v60, %v59
  %v74 = vpack.c.b16 %v62, %v61
  %v75 = vpack.c.b16 %v64, %v63
  %v76 = vpack.c.b16 %v66, %v65
  %v77 = vpack.c.b16 %v68, %v67
  %v78 = vpack.c.b16 %v70, %v69
  %v84 = vunpack.c.l.b16 %v34
  %v85 = vunpack.c.l.b16 %v35
  %v86 = vunpack.c.l.b16 %v36
  %v87 = vunpack.c.l.b16 %v37
  %v88 = vunpack.c.l.b16 %v38
  %v89 = vpack.c.b16 %v85, %v84
  %v90 = vpack.c.b16 %v87, %v86
  %v91 = vpack.c.b16 %v88, %v88
  %vm94 = vcmask 326656
  %v96 = vsel %vm94, %v71, 0
  %v99 = vsel %vm94, %v72, 0
  %v102 = vsel %vm94, %v73, 0
  %v105 = vsel %vm94, %v74, 0
  %v108 = vsel %vm94, %v75, 0
  %v111 = vsel %vm94, %v76, 0
  %v114 = vsel %vm94, %v77, 0
  %v117 = vsel %vm94, %v78, 0
  %vm119 = vcmask 1043456
  %v121 = vsel %vm119, %v91, 0
  %123 = vmatprep.subr.bf16.mxu0 0
  %124 = vmatpush1.bf16.msra.mxu0 %v89
  %125 = vmatprep.subr.bf16.mxu0 0
  %126 = vmatpush1.bf16.msra.mxu0 %v90
  %127 = vmatprep.subr.bf16.mxu0 0
  %128 = vmatpush1.bf16.msra.mxu0 %v121
  %129 = vmatprep.subr.bf16.mxu0 0
  %130 = vmatpush1.bf16.msra.mxu0 0
  %131 = vmatprep.subr.bf16.mxu0 0
  %132 = vmatpush1.bf16.msra.mxu0 0
  %133 = vmatprep.subr.bf16.mxu0 0
  %134 = vmatpush1.bf16.msra.mxu0 0
  %135 = vmatprep.subr.bf16.mxu0 0
  %136 = vmatpush1.bf16.msra.mxu0 0
  %137 = vmatprep.subr.bf16.mxu0 0
  %138 = vmatpush1.bf16.msra.mxu0 0
  %139 = vmatprep.subr.bf16.mxu0 0
  %140 = vmatpush1.bf16.msra.mxu0 0
  %141 = vmatprep.subr.bf16.mxu0 0
  %142 = vmatpush1.bf16.msra.mxu0 0
  %143 = vmatprep.subr.bf16.mxu0 0
  %144 = vmatpush1.bf16.msra.mxu0 0
  %145 = vmatprep.subr.bf16.mxu0 0
  %146 = vmatpush1.bf16.msra.mxu0 0
  %147 = vmatprep.subr.bf16.mxu0 0
  %148 = vmatpush1.bf16.msra.mxu0 0
  %149 = vmatprep.subr.bf16.mxu0 0
  %150 = vmatpush1.bf16.msra.mxu0 0
  %151 = vmatprep.subr.bf16.mxu0 0
  %152 = vmatpush1.bf16.msra.mxu0 0
  %153 = vmatprep.subr.bf16.mxu0 0
  %154 = vmatpush1.bf16.msra.mxu0 0
  %155 = vmatprep.mubr.bf16.mxu0 0
  %156 = vmatmul.mubr.bf16.gmra.mrb[0].mxu0 %v96
  %v157 = vpop.f32.mrb[0].mxu0
  %v158 = vadd.f32 0.0, %v157
  %v159 = vpop.f32.mrb[0].mxu0
  %v160 = vpop.f32.mrb[0].mxu0
  %v161 = vadd.f32 0.0, %v160
  %v162 = vpop.f32.mrb[0].mxu0
  %163 = vmatprep.mubr.bf16.mxu0 0
  %164 = vmatmul.mubr.bf16.gmra.mrb[0].mxu0 %v99
  %v165 = vpop.f32.mrb[0].mxu0
  %v166 = vadd.f32 0.0, %v165
  %v167 = vpop.f32.mrb[0].mxu0
  %v168 = vpop.f32.mrb[0].mxu0
  %v169 = vadd.f32 0.0, %v168
  %v170 = vpop.f32.mrb[0].mxu0
  %171 = vmatprep.mubr.bf16.mxu0 0
  %172 = vmatmul.mubr.bf16.gmra.mrb[0].mxu0 %v102
  %v173 = vpop.f32.mrb[0].mxu0
  %v174 = vadd.f32 0.0, %v173
  %v175 = vpop.f32.mrb[0].mxu0
  %v176 = vpop.f32.mrb[0].mxu0
  %v177 = vadd.f32 0.0, %v176
  %v178 = vpop.f32.mrb[0].mxu0
  %179 = vmatprep.mubr.bf16.mxu0 0
  %180 = vmatmul.mubr.bf16.gmra.mrb[0].mxu0 %v105
  %v181 = vpop.f32.mrb[0].mxu0
  %v182 = vadd.f32 0.0, %v181
  %v183 = vpop.f32.mrb[0].mxu0
  %v184 = vpop.f32.mrb[0].mxu0
  %v185 = vadd.f32 0.0, %v184
  %v186 = vpop.f32.mrb[0].mxu0
  %187 = vmatprep.mubr.bf16.mxu0 0
  %188 = vmatmul.mubr.bf16.gmra.mrb[0].mxu0 %v108
  %v189 = vpop.f32.mrb[0].mxu0
  %v190 = vadd.f32 0.0, %v189
  %v191 = vpop.f32.mrb[0].mxu0
  %v192 = vpop.f32.mrb[0].mxu0
  %v193 = vadd.f32 0.0, %v192
  %v194 = vpop.f32.mrb[0].mxu0
  %195 = vmatprep.mubr.bf16.mxu0 0
  %196 = vmatmul.mubr.bf16.gmra.mrb[0].mxu0 %v111
  %v197 = vpop.f32.mrb[0].mxu0
  %v198 = vadd.f32 0.0, %v197
  %v199 = vpop.f32.mrb[0].mxu0
  %v200 = vpop.f32.mrb[0].mxu0
  %v201 = vadd.f32 0.0, %v200
  %v202 = vpop.f32.mrb[0].mxu0
  %203 = vmatprep.mubr.bf16.mxu0 0
  %204 = vmatmul.mubr.bf16.gmra.mrb[0].mxu0 %v114
  %v205 = vpop.f32.mrb[0].mxu0
  %v206 = vadd.f32 0.0, %v205
  %v207 = vpop.f32.mrb[0].mxu0
  %v208 = vpop.f32.mrb[0].mxu0
  %v209 = vadd.f32 0.0, %v208
  %v210 = vpop.f32.mrb[0].mxu0
  %211 = vmatprep.mubr.bf16.mxu0 0
  %212 = vmatmul.mubr.bf16.gmra.mrb[0].mxu0 %v117
  %v213 = vpop.f32.mrb[0].mxu0
  %v214 = vadd.f32 0.0, %v213
  %v215 = vpop.f32.mrb[0].mxu0
  %v216 = vpop.f32.mrb[0].mxu0
  %v217 = vadd.f32 0.0, %v216
  %v218 = vpop.f32.mrb[0].mxu0
  %219 = vdwg.mxu0
  %v220 = vld [vmem:[%s2] sm:$0x1]
  %v222 = vlaneseq
  %v223 = vshrl.u32 %v222, 7
  %v224 = vsub.s32 0, %v223
  %v225 = vrot.slane %v220, %v224
  %v227 = vadd.f32 %v158, %v225
  %v228 = vadd.f32 %v161, %v225
  %v229 = vadd.f32 %v166, %v225
  %v230 = vadd.f32 %v169, %v225
  %v231 = vadd.f32 %v174, %v225
  %v232 = vadd.f32 %v177, %v225
  %v233 = vadd.f32 %v182, %v225
  %v234 = vadd.f32 %v185, %v225
  %v235 = vadd.f32 %v190, %v225
  %v236 = vadd.f32 %v193, %v225
  %v237 = vadd.f32 %v198, %v225
  %v238 = vadd.f32 %v201, %v225
  %v239 = vadd.f32 %v206, %v225
  %v240 = vadd.f32 %v209, %v225
  %v241 = vadd.f32 %v214, %v225
  %v242 = vadd.f32 %v217, %v225
  %v243 = vmul.f32 %v227, 0.5
  %v244 = vmul.f32 %v228, 0.5
  %v245 = vmul.f32 %v229, 0.5
  %v246 = vmul.f32 %v230, 0.5
  %v247 = vmul.f32 %v231, 0.5
  %v248 = vmul.f32 %v232, 0.5
  %v249 = vmul.f32 %v233, 0.5
  %v250 = vmul.f32 %v234, 0.5
  %v251 = vmul.f32 %v235, 0.5
  %v252 = vmul.f32 %v236, 0.5
  %v253 = vmul.f32 %v237, 0.5
  %v254 = vmul.f32 %v238, 0.5
  %v255 = vmul.f32 %v239, 0.5
  %v256 = vmul.f32 %v240, 0.5
  %v257 = vmul.f32 %v241, 0.5
  %v258 = vmul.f32 %v242, 0.5
  %v259 = vmul.f32 %v227, 0.70710677
  %v260 = vmul.f32 %v228, 0.70710677
  %v261 = vmul.f32 %v229, 0.70710677
  %v262 = vmul.f32 %v230, 0.70710677
  %v263 = vmul.f32 %v231, 0.70710677
  %v264 = vmul.f32 %v232, 0.70710677
  %v265 = vmul.f32 %v233, 0.70710677
  %v266 = vmul.f32 %v234, 0.70710677
  %v267 = vmul.f32 %v235, 0.70710677
  %v268 = vmul.f32 %v236, 0.70710677
  %v269 = vmul.f32 %v237, 0.70710677
  %v270 = vmul.f32 %v238, 0.70710677
  %v271 = vmul.f32 %v239, 0.70710677
  %v272 = vmul.f32 %v240, 0.70710677
  %v273 = vmul.f32 %v241, 0.70710677
  %v274 = vmul.f32 %v242, 0.70710677
  %v275 = verf.f32.pop %v259
  %v276 = verf.f32.pop %v260
  %v277 = verf.f32.pop %v261
  %v278 = verf.f32.pop %v262
  %v279 = verf.f32.pop %v263
  %v280 = verf.f32.pop %v264
  %v281 = verf.f32.pop %v265
  %v282 = verf.f32.pop %v266
  %v283 = verf.f32.pop %v267
  %v284 = verf.f32.pop %v268
  %v285 = verf.f32.pop %v269
  %v286 = verf.f32.pop %v270
  %v287 = verf.f32.pop %v271
  %v288 = verf.f32.pop %v272
  %v289 = verf.f32.pop %v273
  %v290 = verf.f32.pop %v274
  %v291 = vadd.f32 %v275, 1.0
  %v292 = vadd.f32 %v276, 1.0
  %v293 = vadd.f32 %v277, 1.0
  %v294 = vadd.f32 %v278, 1.0
  %v295 = vadd.f32 %v279, 1.0
  %v296 = vadd.f32 %v280, 1.0
  %v297 = vadd.f32 %v281, 1.0
  %v298 = vadd.f32 %v282, 1.0
  %v299 = vadd.f32 %v283, 1.0
  %v300 = vadd.f32 %v284, 1.0
  %v301 = vadd.f32 %v285, 1.0
  %v302 = vadd.f32 %v286, 1.0
  %v303 = vadd.f32 %v287, 1.0
  %v304 = vadd.f32 %v288, 1.0
  %v305 = vadd.f32 %v289, 1.0
  %v306 = vadd.f32 %v290, 1.0
  %v307 = vmul.f32 %v243, %v291
  %v308 = vmul.f32 %v244, %v292
  %v309 = vmul.f32 %v245, %v293
  %v310 = vmul.f32 %v246, %v294
  %v311 = vmul.f32 %v247, %v295
  %v312 = vmul.f32 %v248, %v296
  %v313 = vmul.f32 %v249, %v297
  %v314 = vmul.f32 %v250, %v298
  %v315 = vmul.f32 %v251, %v299
  %v316 = vmul.f32 %v252, %v300
  %v317 = vmul.f32 %v253, %v301
  %v318 = vmul.f32 %v254, %v302
  %v319 = vmul.f32 %v255, %v303
  %v320 = vmul.f32 %v256, %v304
  %v321 = vmul.f32 %v257, %v305
  %v322 = vmul.f32 %v258, %v306
  %vm323 = vcmask 64512
  %324 = vst.msk [vmem:[%s3] sm:$0xff] %vm323, %v307
  %325 = vst.msk [vmem:[%s3 + $0x8] sm:$0xff] %vm323, %v308
  %326 = vst.msk [vmem:[%s3 + $0x10] sm:$0xff] %vm323, %v309
  %327 = vst.msk [vmem:[%s3 + $0x18] sm:$0xff] %vm323, %v310
  %328 = vst.msk [vmem:[%s3 + $0x20] sm:$0xff] %vm323, %v311
  %329 = vst.msk [vmem:[%s3 + $0x28] sm:$0xff] %vm323, %v312
  %330 = vst.msk [vmem:[%s3 + $0x30] sm:$0xff] %vm323, %v313
  %331 = vst.msk [vmem:[%s3 + $0x38] sm:$0xff] %vm323, %v314
  %332 = vst.msk [vmem:[%s3 + $0x40] sm:$0xff] %vm323, %v315
  %333 = vst.msk [vmem:[%s3 + $0x48] sm:$0xff] %vm323, %v316
  %334 = vst.msk [vmem:[%s3 + $0x50] sm:$0xff] %vm323, %v317
  %335 = vst.msk [vmem:[%s3 + $0x58] sm:$0xff] %vm323, %v318
  %336 = vst.msk [vmem:[%s3 + $0x60] sm:$0xff] %vm323, %v319
  %337 = vst.msk [vmem:[%s3 + $0x68] sm:$0xff] %vm323, %v320
  %338 = vst.msk [vmem:[%s3 + $0x70] sm:$0xff] %vm323, %v321
  %339 = vst.msk [vmem:[%s3 + $0x78] sm:$0xff] %vm323, %v322
  %p340 = scmp.ne.s32.totalorder 0, 0
  // Predicated region
  $region14: #{downunit_forward.2} parent=0 // pred_check
    %p341 = pneg %p340
  $region15: #{downunit_forward.2} parent=0 // pred_check_branch
    %343 = sbr.rel (%p341) target = $region17
  $region16: #{downunit_forward.2} parent=0 // pred_region
    %v344 = vsel %vm323, %v307, 0.0
    %v345 = vsel %vm323, %v308, 0.0
    %v346 = vadd.f32 %v344, %v345
    %v347 = vsel %vm323, %v309, 0.0
    %v348 = vadd.f32 %v346, %v347
    %v349 = vsel %vm323, %v310, 0.0
    %v350 = vadd.f32 %v348, %v349
    %v351 = vsel %vm323, %v311, 0.0
    %v352 = vadd.f32 %v350, %v351
    %v353 = vsel %vm323, %v312, 0.0
    %v354 = vadd.f32 %v352, %v353
    %v355 = vsel %vm323, %v313, 0.0
    %v356 = vadd.f32 %v354, %v355
    %v357 = vsel %vm323, %v314, 0.0
    %v358 = vadd.f32 %v356, %v357
    %v359 = vsel %vm323, %v315, 0.0
    %v360 = vadd.f32 %v358, %v359
    %v361 = vsel %vm323, %v316, 0.0
    %v362 = vadd.f32 %v360, %v361
    %v363 = vsel %vm323, %v317, 0.0
    %v364 = vadd.f32 %v362, %v363
    %v365 = vsel %vm323, %v318, 0.0
    %v366 = vadd.f32 %v364, %v365
    %v367 = vsel %vm323, %v319, 0.0
    %v368 = vadd.f32 %v366, %v367
    %v369 = vsel %vm323, %v320, 0.0
    %v370 = vadd.f32 %v368, %v369
    %v371 = vsel %vm323, %v321, 0.0
    %v372 = vadd.f32 %v370, %v371
    %v373 = vsel %vm323, %v322, 0.0
    %v374 = vadd.f32 %v372, %v373
    %v375 = vrot.slane %v374, 4
    %v376 = vadd.f32 %v374, %v375
    %v377 = vrot.slane %v376, 2
    %v378 = vadd.f32 %v376, %v377
    %v379 = vrot.slane %v378, 1
    %v380 = vadd.f32 %v378, %v379
    %vm381 = vcmask 57344
    %382 = vst.msk [vmem:[%s4] sm:$0x1] %vm381, %v380
    %v383 = vmul.f32 %v307, %v307
    %v384 = vmul.f32 %v308, %v308
    %v385 = vmul.f32 %v309, %v309
    %v386 = vmul.f32 %v310, %v310
    %v387 = vmul.f32 %v311, %v311
    %v388 = vmul.f32 %v312, %v312
    %v389 = vmul.f32 %v313, %v313
    %v390 = vmul.f32 %v314, %v314
    %v391 = vmul.f32 %v315, %v315
    %v392 = vmul.f32 %v316, %v316
    %v393 = vmul.f32 %v317, %v317
    %v394 = vmul.f32 %v318, %v318
    %v395 = vmul.f32 %v319, %v319
    %v396 = vmul.f32 %v320, %v320
    %v397 = vmul.f32 %v321, %v321
    %v398 = vmul.f32 %v322, %v322
    %v399 = vsel %vm323, %v383, 0.0
    %v400 = vsel %vm323, %v384, 0.0
    %v401 = vadd.f32 %v399, %v400
    %v402 = vsel %vm323, %v385, 0.0
    %v403 = vadd.f32 %v401, %v402
    %v404 = vsel %vm323, %v386, 0.0
    %v405 = vadd.f32 %v403, %v404
    %v406 = vsel %vm323, %v387, 0.0
    %v407 = vadd.f32 %v405, %v406
    %v408 = vsel %vm323, %v388, 0.0
    %v409 = vadd.f32 %v407, %v408
    %v410 = vsel %vm323, %v389, 0.0
    %v411 = vadd.f32 %v409, %v410
    %v412 = vsel %vm323, %v390, 0.0
    %v413 = vadd.f32 %v411, %v412
    %v414 = vsel %vm323, %v391, 0.0
    %v415 = vadd.f32 %v413, %v414
    %v416 = vsel %vm323, %v392, 0.0
    %v417 = vadd.f32 %v415, %v416
    %v418 = vsel %vm323, %v393, 0.0
    %v419 = vadd.f32 %v417, %v418
    %v420 = vsel %vm323, %v394, 0.0
    %v421 = vadd.f32 %v419, %v420
    %v422 = vsel %vm323, %v395, 0.0
    %v423 = vadd.f32 %v421, %v422
    %v424 = vsel %vm323, %v396, 0.0
    %v425 = vadd.f32 %v423, %v424
    %v426 = vsel %vm323, %v397, 0.0
    %v427 = vadd.f32 %v425, %v426
    %v428 = vsel %vm323, %v398, 0.0
    %v429 = vadd.f32 %v427, %v428
    %v430 = vrot.slane %v429, 4
    %v431 = vadd.f32 %v429, %v430
    %v432 = vrot.slane %v431, 2
    %v433 = vadd.f32 %v431, %v432
    %v434 = vrot.slane %v433, 1
    %v435 = vadd.f32 %v433, %v434
    %436 = vst.msk [vmem:[%s5] sm:$0x1] %vm381, %v435
  $region17: #{downunit_forward.2} parent=0 // pred_fallthru
    _
  %p437 = scmp.eq.s32.totalorder 0, 0
  // Predicated region
  $region18: #{downunit_forward.2} parent=0 // pred_check
    %p438 = pneg %p437
  $region19: #{downunit_forward.2} parent=0 // pred_check_branch
    %440 = sbr.rel (%p438) target = $region21
  $region20: #{downunit_forward.2} parent=0 // pred_region
    %s441 = smul.u32 0, 128
    %v442 = vlaneseq
    %v443 = vshrl.u32 %v442, 7
    %v444 = vadd.s32 %v443, 8
    %v445 = vadd.s32 %v443, 16
    %v446 = vadd.s32 %v443, 24
    %v447 = vadd.s32 %v443, 32
    %v448 = vadd.s32 %v443, 40
    %v449 = vadd.s32 %v443, 48
    %v450 = vadd.s32 %v443, 56
    %v451 = vadd.s32 %v443, 64
    %v452 = vadd.s32 %v443, 72
    %v453 = vadd.s32 %v443, 80
    %v454 = vadd.s32 %v443, 88
    %v455 = vadd.s32 %v443, 96
    %v456 = vadd.s32 %v443, 104
    %v457 = vadd.s32 %v443, 112
    %v458 = vadd.s32 %v443, 120
    %v459 = vstv %s441
    %v460 = vadd.s32 %v459, %v443
    %v461 = vadd.s32 %v459, %v444
    %v462 = vadd.s32 %v459, %v445
    %v463 = vadd.s32 %v459, %v446
    %v464 = vadd.s32 %v459, %v447
    %v465 = vadd.s32 %v459, %v448
    %v466 = vadd.s32 %v459, %v449
    %v467 = vadd.s32 %v459, %v450
    %v468 = vadd.s32 %v459, %v451
    %v469 = vadd.s32 %v459, %v452
    %v470 = vadd.s32 %v459, %v453
    %v471 = vadd.s32 %v459, %v454
    %v472 = vadd.s32 %v459, %v455
    %v473 = vadd.s32 %v459, %v456
    %v474 = vadd.s32 %v459, %v457
    %v475 = vadd.s32 %v459, %v458
    %vm476 = vcmp.lt.s32.totalorder %v460, 128
    %vm477 = vcmp.lt.s32.totalorder %v461, 128
    %vm478 = vcmp.lt.s32.totalorder %v462, 128
    %vm479 = vcmp.lt.s32.totalorder %v463, 128
    %vm480 = vcmp.lt.s32.totalorder %v464, 128
    %vm481 = vcmp.lt.s32.totalorder %v465, 128
    %vm482 = vcmp.lt.s32.totalorder %v466, 128
    %vm483 = vcmp.lt.s32.totalorder %v467, 128
    %vm484 = vcmp.lt.s32.totalorder %v468, 128
    %vm485 = vcmp.lt.s32.totalorder %v469, 128
    %vm486 = vcmp.lt.s32.totalorder %v470, 128
    %vm487 = vcmp.lt.s32.totalorder %v471, 128
    %vm488 = vcmp.lt.s32.totalorder %v472, 128
    %vm489 = vcmp.lt.s32.totalorder %v473, 128
    %vm490 = vcmp.lt.s32.totalorder %v474, 128
    %vm491 = vcmp.lt.s32.totalorder %v475, 128
    %v492 = vsel %vm476, %v307, 0.0
    %v493 = vsel %vm477, %v308, 0.0
    %v494 = vsel %vm478, %v309, 0.0
    %v495 = vsel %vm479, %v310, 0.0
    %v496 = vsel %vm480, %v311, 0.0
    %v497 = vsel %vm481, %v312, 0.0
    %v498 = vsel %vm482, %v313, 0.0
    %v499 = vsel %vm483, %v314, 0.0
    %v500 = vsel %vm484, %v315, 0.0
    %v501 = vsel %vm485, %v316, 0.0
    %v502 = vsel %vm486, %v317, 0.0
    %v503 = vsel %vm487, %v318, 0.0
    %v504 = vsel %vm488, %v319, 0.0
    %v505 = vsel %vm489, %v320, 0.0
    %v506 = vsel %vm490, %v321, 0.0
    %v507 = vsel %vm491, %v322, 0.0
    %v508 = vsel %vm323, %v492, 0.0
    %v509 = vsel %vm323, %v493, 0.0
    %v510 = vadd.f32 %v508, %v509
    %v511 = vsel %vm323, %v494, 0.0
    %v512 = vadd.f32 %v510, %v511
    %v513 = vsel %vm323, %v495, 0.0
    %v514 = vadd.f32 %v512, %v513
    %v515 = vsel %vm323, %v496, 0.0
    %v516 = vadd.f32 %v514, %v515
    %v517 = vsel %vm323, %v497, 0.0
    %v518 = vadd.f32 %v516, %v517
    %v519 = vsel %vm323, %v498, 0.0
    %v520 = vadd.f32 %v518, %v519
    %v521 = vsel %vm323, %v499, 0.0
    %v522 = vadd.f32 %v520, %v521
    %v523 = vsel %vm323, %v500, 0.0
    %v524 = vadd.f32 %v522, %v523
    %v525 = vsel %vm323, %v501, 0.0
    %v526 = vadd.f32 %v524, %v525
    %v527 = vsel %vm323, %v502, 0.0
    %v528 = vadd.f32 %v526, %v527
    %v529 = vsel %vm323, %v503, 0.0
    %v530 = vadd.f32 %v528, %v529
    %v531 = vsel %vm323, %v504, 0.0
    %v532 = vadd.f32 %v530, %v531
    %v533 = vsel %vm323, %v505, 0.0
    %v534 = vadd.f32 %v532, %v533
    %v535 = vsel %vm323, %v506, 0.0
    %v536 = vadd.f32 %v534, %v535
    %v537 = vsel %vm323, %v507, 0.0
    %v538 = vadd.f32 %v536, %v537
    %v539 = vrot.slane %v538, 4
    %v540 = vadd.f32 %v538, %v539
    %v541 = vrot.slane %v540, 2
    %v542 = vadd.f32 %v540, %v541
    %v543 = vrot.slane %v542, 1
    %v544 = vadd.f32 %v542, %v543
    %vm545 = vcmask 57344
    %546 = vst.msk [vmem:[%s4] sm:$0x1] %vm545, %v544
    %v547 = vmul.f32 %v492, %v492
    %v548 = vmul.f32 %v493, %v493
    %v549 = vmul.f32 %v494, %v494
    %v550 = vmul.f32 %v495, %v495
    %v551 = vmul.f32 %v496, %v496
    %v552 = vmul.f32 %v497, %v497
    %v553 = vmul.f32 %v498, %v498
    %v554 = vmul.f32 %v499, %v499
    %v555 = vmul.f32 %v500, %v500
    %v556 = vmul.f32 %v501, %v501
    %v557 = vmul.f32 %v502, %v502
    %v558 = vmul.f32 %v503, %v503
    %v559 = vmul.f32 %v504, %v504
    %v560 = vmul.f32 %v505, %v505
    %v561 = vmul.f32 %v506, %v506
    %v562 = vmul.f32 %v507, %v507
    %v563 = vsel %vm323, %v547, 0.0
    %v564 = vsel %vm323, %v548, 0.0
    %v565 = vadd.f32 %v563, %v564
    %v566 = vsel %vm323, %v549, 0.0
    %v567 = vadd.f32 %v565, %v566
    %v568 = vsel %vm323, %v550, 0.0
    %v569 = vadd.f32 %v567, %v568
    %v570 = vsel %vm323, %v551, 0.0
    %v571 = vadd.f32 %v569, %v570
    %v572 = vsel %vm323, %v552, 0.0
    %v573 = vadd.f32 %v571, %v572
    %v574 = vsel %vm323, %v553, 0.0
    %v575 = vadd.f32 %v573, %v574
    %v576 = vsel %vm323, %v554, 0.0
    %v577 = vadd.f32 %v575, %v576
    %v578 = vsel %vm323, %v555, 0.0
    %v579 = vadd.f32 %v577, %v578
    %v580 = vsel %vm323, %v556, 0.0
    %v581 = vadd.f32 %v579, %v580
    %v582 = vsel %vm323, %v557, 0.0
    %v583 = vadd.f32 %v581, %v582
    %v584 = vsel %vm323, %v558, 0.0
    %v585 = vadd.f32 %v583, %v584
    %v586 = vsel %vm323, %v559, 0.0
    %v587 = vadd.f32 %v585, %v586
    %v588 = vsel %vm323, %v560, 0.0
    %v589 = vadd.f32 %v587, %v588
    %v590 = vsel %vm323, %v561, 0.0
    %v591 = vadd.f32 %v589, %v590
    %v592 = vsel %vm323, %v562, 0.0
    %v593 = vadd.f32 %v591, %v592
    %v594 = vrot.slane %v593, 4
    %v595 = vadd.f32 %v593, %v594
    %v596 = vrot.slane %v595, 2
    %v597 = vadd.f32 %v595, %v596
    %v598 = vrot.slane %v597, 1
    %v599 = vadd.f32 %v597, %v598
    %600 = vst.msk [vmem:[%s5] sm:$0x1] %vm545, %v599
  $region21: #{downunit_forward.2} parent=0 // pred_fallthru
    _
  // Predicated region
  $region22: #{downunit_forward.2} parent=0 // pred_check
    _
  $region23: #{downunit_forward.2} parent=0 // pred_check_branch
    %602 = sbr.rel (0) target = $region25
  $region24: #{downunit_forward.2} parent=0 // pred_region
    _
  $region25: #{downunit_forward.2} parent=0 // pred_fallthru
    _
  // Predicated region
  $region26: #{downunit_forward.2} parent=0 // pred_check
    _
  $region27: #{downunit_forward.2} parent=0 // pred_check_branch
    %604 = sbr.rel (0) target = $region29
  $region28: #{downunit_forward.2} parent=0 // pred_region
    _
  $region29: #{downunit_forward.2} parent=0 // pred_fallthru
    _
  // Predicated region
  $region30: #{downunit_forward.2} parent=0 // pred_check
    _
  $region31: #{downunit_forward.2} parent=0 // pred_check_branch
    %606 = sbr.rel (0) target = $region33
  $region32: #{downunit_forward.2} parent=0 // pred_region
    _
  $region33: #{downunit_forward.2} parent=0 // pred_fallthru
    _
  // Predicated region
  $region34: #{downunit_forward.2} parent=0 // pred_check
    _
  $region35: #{downunit_forward.2} parent=0 // pred_check_branch
    %608 = sbr.rel (0) target = $region37
  $region36: #{downunit_forward.2} parent=0 // pred_region
    _
  $region37: #{downunit_forward.2} parent=0 // pred_fallthru
    _
  // Predicated region
  $region38: #{downunit_forward.2} parent=0 // pred_check
    _
  $region39: #{downunit_forward.2} parent=0 // pred_check_branch
    %610 = sbr.rel (0) target = $region41
  $region40: #{downunit_forward.2} parent=0 // pred_region
    _
  $region41: #{downunit_forward.2} parent=0 // pred_fallthru
    _
  // Predicated region
  $region42: #{downunit_forward.2} parent=0 // pred_check
    _
  $region43: #{downunit_forward.2} parent=0 // pred_check_branch
    %612 = sbr.rel (0) target = $region45
  $region44: #{downunit_forward.2} parent=0 // pred_region
    _
  $region45: #{downunit_forward.2} parent=0 // pred_fallthru
    _

</llo_original>
